<compile_context>
chip_gen: v7x
topology: tpu7x:2x2x1
jax: 0.10.0
libtpu: 0.0.40
codegen_flags: <defaults>
</compile_context>

<pallas_src>
import functools
import math

import jax
import jax.numpy as jnp
from jax.experimental import pallas as pl
from jax.experimental.pallas import tpu as pltpu


def _round_up(x: int, m: int) -> int:
    return ((x + m - 1) // m) * m


def _sublane_for(dtype) -> int:
    itemsize = jnp.dtype(dtype).itemsize
    if itemsize == 1:
        return 32
    if itemsize == 2:
        return 16
    return 8


def _choose_batch_tile(B: int, sublane: int, cap: int = 512):
    """Largest sublane-multiple tile that divides round_up(B, sublane) (so
    batch padding is < sublane rows), then split to >=2 blocks if possible
    so the v7x second TensorCore is not idle."""
    b_rounded = _round_up(max(B, 1), sublane)
    tb = sublane
    t = sublane
    limit = min(cap, b_rounded)
    while t <= limit:
        if b_rounded % t == 0:
            tb = t
        t += sublane
    if b_rounded // tb < 2 and b_rounded >= 2 * sublane:
        best = sublane
        t = sublane
        while t <= b_rounded // 2:
            if b_rounded % t == 0:
                best = t
            t += sublane
        tb = best
    return tb, b_rounded


def _choose_k_tile(D: int, cap: int = 2048):
    """Pick (TK, Dused).  Prefer TK that divides D exactly (no padded copy of
    x); otherwise pad D to a 128-multiple."""
    d_pad128 = _round_up(max(D, 1), 128)
    if d_pad128 <= cap:
        return d_pad128, d_pad128
    for cand in range(cap, 127, -128):
        if D % cand == 0:
            return cand, D
    for cand in range(cap, 127, -128):
        if d_pad128 % cand == 0:
            return cand, d_pad128
    return 128, d_pad128


# ---------------------------------------------------------------- kernels ---


def _linear_kernel_single(x_ref, w_ref, b_ref, o_ref):
    # Single reduction tile: no accumulator round-trip, bias added inline.
    o_ref[...] = (
        jnp.dot(x_ref[...], w_ref[...], preferred_element_type=jnp.float32)
        + b_ref[...]
    ).astype(o_ref.dtype)


def _linear_kernel_resident(x_ref, w_ref, b_ref, o_ref, acc_ref, *, tk):
    # W^T is resident in VMEM (constant block index); slice the K chunk here.
    k = pl.program_id(1)

    @pl.when(k == 0)
    def _():
        acc_ref[...] = jnp.zeros_like(acc_ref)

    start = pl.multiple_of(k * tk, tk)
    acc_ref[...] += jnp.dot(
        x_ref[...], w_ref[pl.ds(start, tk), :],
        preferred_element_type=jnp.float32,
    )

    @pl.when(k == pl.num_programs(1) - 1)
    def _():
        o_ref[...] = (acc_ref[...] + b_ref[...]).astype(o_ref.dtype)


def _linear_kernel_stream(x_ref, w_ref, b_ref, o_ref, acc_ref):
    # Fallback for very large W: stream (TK, Lpad) weight tiles per k-step.
    k = pl.program_id(1)

    @pl.when(k == 0)
    def _():
        acc_ref[...] = jnp.zeros_like(acc_ref)

    acc_ref[...] += jnp.dot(
        x_ref[...], w_ref[...], preferred_element_type=jnp.float32
    )

    @pl.when(k == pl.num_programs(1) - 1)
    def _():
        o_ref[...] = (acc_ref[...] + b_ref[...]).astype(o_ref.dtype)


# ---------------------------------------------------------------- wrapper ---

_W_RESIDENT_BYTES = 8 << 20  # keep W^T resident in VMEM up to this size


def linear_classifier_forward(x, weight, bias):
    """x: [B, ...]; weight: [L, D]; bias: [L] with D = prod(x.shape[1:])."""
    B = x.shape[0]
    D = int(math.prod(x.shape[1:])) if x.ndim > 1 else 1
    L, Dw = weight.shape
    assert Dw == D, f"weight dim {Dw} != flattened input dim {D}"

    x2d = x.reshape(B, D)  # torch's x.view(x.size(0), -1)

    sublane = _sublane_for(x.dtype)
    TB, Bpad = _choose_batch_tile(B, sublane)
    TK, Dused = _choose_k_tile(D)
    Lpad = _round_up(max(L, 128), 128)  # lane-dense output; stays 128 for tiny L

    n_k = Dused // TK
    grid_b = Bpad // TB

    # Pad x only when strictly necessary (avoids a full extra HBM pass).
    if Bpad != B or Dused != D:
        x_in = jnp.zeros((Bpad, Dused), dtype=x2d.dtype).at[:B, :D].set(x2d)
    else:
        x_in = x2d

    # Pre-transposed, padded weight [Dused, Lpad] and f32 bias [1, Lpad].
    # (For a head called every step, hoist by jitting the whole forward or
    #  precomputing these at param-prep time.)
    w_t = jnp.zeros((Dused, Lpad), dtype=weight.dtype).at[:D, :L].set(weight.T)
    b_p = jnp.zeros((1, Lpad), dtype=jnp.float32).at[0, :L].set(
        bias.astype(jnp.float32)
    )

    x_itemsize = jnp.dtype(x.dtype).itemsize
    w_itemsize = jnp.dtype(weight.dtype).itemsize
    w_bytes = Dused * Lpad * w_itemsize
    w_resident = w_bytes <= _W_RESIDENT_BYTES

    out_shape = jax.ShapeDtypeStruct((Bpad, Lpad), x.dtype)

    def _vmem_limit(est_bytes: int) -> int:
        # generous accounting (double-buffered) + headroom, safe on v7x (64 MiB)
        return min(max(32 << 20, 2 * est_bytes + (8 << 20)), 64 << 20)

    if n_k == 1:
        est = (2 * TB * TK * x_itemsize + w_bytes + 2 * Lpad * 4
               + 2 * TB * Lpad * x_itemsize)
        out_padded = pl.pallas_call(
            _linear_kernel_single,
            out_shape=out_shape,
            grid_spec=pltpu.PrefetchScalarGridSpec(
                num_scalar_prefetch=0,
                grid=(grid_b,),
                in_specs=[
                    pl.BlockSpec((TB, TK), lambda i: (i, 0)),        # x tile
                    pl.BlockSpec((Dused, Lpad), lambda i: (0, 0)),   # W^T resident
                    pl.BlockSpec((1, Lpad), lambda i: (0, 0)),       # bias resident
                ],
                out_specs=pl.BlockSpec((TB, Lpad), lambda i: (i, 0)),
            ),
            compiler_params=pltpu.CompilerParams(
                dimension_semantics=("parallel",),
                vmem_limit_bytes=_vmem_limit(est),
            ),
        )(x_in, w_t, b_p)
    elif w_resident:
        est = (2 * TB * TK * x_itemsize + w_bytes + 2 * Lpad * 4
               + 2 * TB * Lpad * x_itemsize + TB * Lpad * 4)
        kernel = functools.partial(_linear_kernel_resident, tk=TK)
        out_padded = pl.pallas_call(
            kernel,
            out_shape=out_shape,
            grid_spec=pltpu.PrefetchScalarGridSpec(
                num_scalar_prefetch=0,
                grid=(grid_b, n_k),
                in_specs=[
                    pl.BlockSpec((TB, TK), lambda i, k: (i, k)),        # x tile
                    pl.BlockSpec((Dused, Lpad), lambda i, k: (0, 0)),   # W^T resident
                    pl.BlockSpec((1, Lpad), lambda i, k: (0, 0)),       # bias
                ],
                out_specs=pl.BlockSpec((TB, Lpad), lambda i, k: (i, 0)),
                scratch_shapes=[pltpu.VMEM((TB, Lpad), jnp.float32)],
            ),
            compiler_params=pltpu.CompilerParams(
                dimension_semantics=("parallel", "arbitrary"),
                vmem_limit_bytes=_vmem_limit(est),
            ),
        )(x_in, w_t, b_p)
    else:
        est = (2 * TB * TK * x_itemsize + 2 * TK * Lpad * w_itemsize
               + 2 * Lpad * 4 + 2 * TB * Lpad * x_itemsize + TB * Lpad * 4)
        out_padded = pl.pallas_call(
            _linear_kernel_stream,
            out_shape=out_shape,
            grid_spec=pltpu.PrefetchScalarGridSpec(
                num_scalar_prefetch=0,
                grid=(grid_b, n_k),
                in_specs=[
                    pl.BlockSpec((TB, TK), lambda i, k: (i, k)),     # x tile
                    pl.BlockSpec((TK, Lpad), lambda i, k: (k, 0)),   # W^T streamed
                    pl.BlockSpec((1, Lpad), lambda i, k: (0, 0)),    # bias
                ],
                out_specs=pl.BlockSpec((TB, Lpad), lambda i, k: (i, 0)),
                scratch_shapes=[pltpu.VMEM((TB, Lpad), jnp.float32)],
            ),
            compiler_params=pltpu.CompilerParams(
                dimension_semantics=("parallel", "arbitrary"),
                vmem_limit_bytes=_vmem_limit(est),
            ),
        )(x_in, w_t, b_p)

    return out_padded[:B, :L]


def init_linear_classifier_params(key, dim, num_labels=1, dtype=jnp.float32):
    """Matches LinearClassifier.reset_params():
    kaiming_normal_(weight, nonlinearity='relu') -> std = sqrt(2 / fan_in),
    bias = 0."""
    std = math.sqrt(2.0 / dim)
    weight = std * jax.random.normal(key, (num_labels, dim), dtype=dtype)
    bias = jnp.zeros((num_labels,), dtype=dtype)
    return weight, bias


if __name__ == "__main__":
    key = jax.random.PRNGKey(0)
    k1, k2, k3, k4, k5, k6 = jax.random.split(key, 6)

    fwd = jax.jit(linear_classifier_forward)

    # 1) Primary example: x [2, 4, 16, 16] -> D=1024, L=4 (single-K fast path).
    x = jax.random.normal(k1, (2, 4, 16, 16), dtype=jnp.float32)
    w, b = init_linear_classifier_params(k2, dim=1024, num_labels=4)
    out = jax.block_until_ready(fwd(x, w, b))
    ref = x.reshape(2, -1) @ w.T + b
    assert out.shape == (2, 4)
    assert jnp.allclose(out, ref, atol=1e-5, rtol=1e-5)

    # 2) Small non-128-multiple D exercises the padding path: D=32, L=4.
    x2 = jax.random.normal(k3, (2, 4, 8), dtype=jnp.float32)
    w2, b2 = init_linear_classifier_params(k4, dim=32, num_labels=4)
    b2 = b2 + 0.5  # nonzero bias
    out2 = jax.block_until_ready(fwd(x2, w2, b2))
    ref2 = x2.reshape(2, -1) @ w2.T + b2
    assert out2.shape == (2, 4)
    assert jnp.allclose(out2, ref2, atol=1e-5, rtol=1e-5)

    # 3) Multi-K resident-weight path with 2 batch blocks: B=16, D=4096, L=3.
    x3 = jax.random.normal(k5, (16, 4096), dtype=jnp.float32)
    w3, b3 = init_linear_classifier_params(k6, dim=4096, num_labels=3)
    b3 = b3 - 0.25
    out3 = jax.block_until_ready(fwd(x3, w3, b3))
    ref3 = x3 @ w3.T + b3
    assert out3.shape == (16, 3)
    assert jnp.allclose(out3, ref3, atol=1e-4, rtol=1e-4)

    print("KERNEL_OK")
</pallas_src>

<mosaic_0001>
module attributes {stable_mosaic.version = 11 : i64} {
  func.func @_linear_kernel_single(%arg0: i32, %arg1: memref<8x1024xf32, #tpu.memory_space<vmem>>, %arg2: memref<1024x128xf32, #tpu.memory_space<vmem>>, %arg3: memref<1x128xf32, #tpu.memory_space<vmem>>, %arg4: memref<8x128xf32, #tpu.memory_space<vmem>>) attributes {dimension_semantics = [#tpu.dimension_semantics<parallel>], iteration_bounds = array<i64: 1>, scalar_prefetch = 0 : i64, scratch_operands = 0 : i64, tpu.core_type = #tpu.core_type<tc>, window_params = [{transform_indices = @transform_0, window_bounds = array<i64: 8, 1024>}, {pipeline_mode = #tpu.pipeline_mode<synchronous>, transform_indices = @transform_1, window_bounds = array<i64: 1024, 128>}, {pipeline_mode = #tpu.pipeline_mode<synchronous>, transform_indices = @transform_2, window_bounds = array<i64: 1, 128>}, {transform_indices = @transform_3, window_bounds = array<i64: 8, 128>}]} {
    %c0 = arith.constant 0 : index
    %c0_0 = arith.constant 0 : index
    %0 = vector.load %arg1[%c0, %c0_0] : memref<8x1024xf32, #tpu.memory_space<vmem>>, vector<8x1024xf32>
    %c0_1 = arith.constant 0 : index
    %c0_2 = arith.constant 0 : index
    %1 = vector.load %arg2[%c0_1, %c0_2] : memref<1024x128xf32, #tpu.memory_space<vmem>>, vector<1024x128xf32>
    %cst = arith.constant dense<0.000000e+00> : vector<8x128xf32>
    %2 = tpu.matmul %0, %1, %cst {dimension_numbers = #tpu.dot_dimension_numbers<[1], [0], [0], [1], [0, 0, 1, 1], [], []>} : vector<8x1024xf32>, vector<1024x128xf32>, vector<8x128xf32> -> vector<8x128xf32>
    %c0_3 = arith.constant 0 : index
    %c0_4 = arith.constant 0 : index
    %3 = vector.load %arg3[%c0_3, %c0_4] : memref<1x128xf32, #tpu.memory_space<vmem>>, vector<1x128xf32>
    %4 = vector.broadcast %3 : vector<1x128xf32> to vector<8x128xf32>
    %5 = arith.addf %2, %4 : vector<8x128xf32>
    %c0_5 = arith.constant 0 : index
    %c0_6 = arith.constant 0 : index
    %6 = vector.load %arg4[%c0_5, %c0_6] : memref<8x128xf32, #tpu.memory_space<vmem>>, vector<8x128xf32>
    tpu.vector_store %arg4[%c0_5, %c0_6], %5 {strides = array<i32>} : memref<8x128xf32, #tpu.memory_space<vmem>>, vector<8x128xf32>,
    return
  }
  func.func @transform_0(%arg0: i32) -> (i32, i32) {
    %c0_i32 = arith.constant 0 : i32
    %c0_i32_0 = arith.constant 0 : i32
    return %arg0, %c0_i32 : i32, i32
  }
  func.func @transform_1(%arg0: i32) -> (i32, i32) {
    %c0_i32 = arith.constant 0 : i32
    %c0_i32_0 = arith.constant 0 : i32
    %c0_i32_1 = arith.constant 0 : i32
    return %c0_i32, %c0_i32_0 : i32, i32
  }
  func.func @transform_2(%arg0: i32) -> (i32, i32) {
    %c0_i32 = arith.constant 0 : i32
    %c0_i32_0 = arith.constant 0 : i32
    %c0_i32_1 = arith.constant 0 : i32
    return %c0_i32, %c0_i32_0 : i32, i32
  }
  func.func @transform_3(%arg0: i32) -> (i32, i32) {
    %c0_i32 = arith.constant 0 : i32
    %c0_i32_0 = arith.constant 0 : i32
    return %arg0, %c0_i32 : i32, i32
  }
}

</mosaic_0001>

<llo_original>
// kernel: linear_classifier_forward.1
$region0: #{linear_classifier_forward.1}
  #allocation0 [shape = 'u32[]', space=smem, size = 0x4, offset = 0x4, fixed_abs, tag = 'smem constant byte address 0x4 - core index']
  #allocation1 [shape = 'u32[144,128]{1,0:T(1,128)}', space=vmem, size = 0x12000, scoped, tag = 'internal scratch']
  %s0 = inlined_call_operand.vmem [shape: f32[8,1024], index: 0, kind: input, shape index: {}]
  %s1 = inlined_call_operand.vmem [shape: f32[1024,128], index: 1, kind: input, shape index: {}]
  %s2 = inlined_call_operand.vmem [shape: f32[1,128], index: 2, kind: input, shape index: {}]
  %s3 = inlined_call_operand.vmem [shape: f32[8,128], index: 3, kind: output, shape index: {}]
  %s4 = sld [smem:[#allocation0]]
  $region22: #{linear_classifier_forward.1} parent=0
    _
  %s6 = ssub.s32 1, %s4
  %s7 = scalar_select 0, %s6, %s4
  // Predicated region
  $region2: #{linear_classifier_forward.1} parent=0 // pred_check
    _
  $region3: #{linear_classifier_forward.1} parent=0 // pred_check_branch
    %9 = sbr.rel (0) target = $region5
  $region4: #{linear_classifier_forward.1} parent=0 // pred_region
    _
  $region5: #{linear_classifier_forward.1} parent=0 // pred_fallthru
    _
  // Predicated region
  $region6: #{linear_classifier_forward.1} parent=0 // pred_check
    _
  $region7: #{linear_classifier_forward.1} parent=0 // pred_check_branch
    %11 = sbr.rel (0) target = $region9
  $region8: #{linear_classifier_forward.1} parent=0 // pred_region
    _
  $region9: #{linear_classifier_forward.1} parent=0 // pred_fallthru
    _
  // Predicated region
  $region10: #{linear_classifier_forward.1} parent=0 // pred_check
    _
  $region11: #{linear_classifier_forward.1} parent=0 // pred_check_branch
    %13 = sbr.rel (0) target = $region13
  $region12: #{linear_classifier_forward.1} parent=0 // pred_region
    _
  $region13: #{linear_classifier_forward.1} parent=0 // pred_fallthru
    _
  %v14 = vld [vmem:[%s0] sm:$0xff]
  %v15 = vld [vmem:[%s0 + $0x8] sm:$0xff]
  %v16 = vld [vmem:[%s0 + $0x10] sm:$0xff]
  %v17 = vld [vmem:[%s0 + $0x18] sm:$0xff]
  %v18 = vld [vmem:[%s0 + $0x20] sm:$0xff]
  %v19 = vld [vmem:[%s0 + $0x28] sm:$0xff]
  %v20 = vld [vmem:[%s0 + $0x30] sm:$0xff]
  %v21 = vld [vmem:[%s0 + $0x38] sm:$0xff]
  %v22 = vld [vmem:[%s1] sm:$0xff]
  %v23 = vld [vmem:[%s1 + $0x8] sm:$0xff]
  %v24 = vld [vmem:[%s1 + $0x10] sm:$0xff]
  %v25 = vld [vmem:[%s1 + $0x18] sm:$0xff]
  %v26 = vld [vmem:[%s1 + $0x20] sm:$0xff]
  %v27 = vld [vmem:[%s1 + $0x28] sm:$0xff]
  %v28 = vld [vmem:[%s1 + $0x30] sm:$0xff]
  %v29 = vld [vmem:[%s1 + $0x38] sm:$0xff]
  %v30 = vld [vmem:[%s1 + $0x40] sm:$0xff]
  %v31 = vld [vmem:[%s1 + $0x48] sm:$0xff]
  %v32 = vld [vmem:[%s1 + $0x50] sm:$0xff]
  %v33 = vld [vmem:[%s1 + $0x58] sm:$0xff]
  %v34 = vld [vmem:[%s1 + $0x60] sm:$0xff]
  %v35 = vld [vmem:[%s1 + $0x68] sm:$0xff]
  %v36 = vld [vmem:[%s1 + $0x70] sm:$0xff]
  %v37 = vld [vmem:[%s1 + $0x78] sm:$0xff]
  %v38 = vld [vmem:[%s1 + $0x80] sm:$0xff]
  %v39 = vld [vmem:[%s1 + $0x88] sm:$0xff]
  %v40 = vld [vmem:[%s1 + $0x90] sm:$0xff]
  %v41 = vld [vmem:[%s1 + $0x98] sm:$0xff]
  %v42 = vld [vmem:[%s1 + $0xa0] sm:$0xff]
  %v43 = vld [vmem:[%s1 + $0xa8] sm:$0xff]
  %v44 = vld [vmem:[%s1 + $0xb0] sm:$0xff]
  %v45 = vld [vmem:[%s1 + $0xb8] sm:$0xff]
  %v46 = vld [vmem:[%s1 + $0xc0] sm:$0xff]
  %v47 = vld [vmem:[%s1 + $0xc8] sm:$0xff]
  %v48 = vld [vmem:[%s1 + $0xd0] sm:$0xff]
  %v49 = vld [vmem:[%s1 + $0xd8] sm:$0xff]
  %v50 = vld [vmem:[%s1 + $0xe0] sm:$0xff]
  %v51 = vld [vmem:[%s1 + $0xe8] sm:$0xff]
  %v52 = vld [vmem:[%s1 + $0xf0] sm:$0xff]
  %v53 = vld [vmem:[%s1 + $0xf8] sm:$0xff]
  %v54 = vld [vmem:[%s1 + $0x100] sm:$0xff]
  %v55 = vld [vmem:[%s1 + $0x108] sm:$0xff]
  %v56 = vld [vmem:[%s1 + $0x110] sm:$0xff]
  %v57 = vld [vmem:[%s1 + $0x118] sm:$0xff]
  %v58 = vld [vmem:[%s1 + $0x120] sm:$0xff]
  %v59 = vld [vmem:[%s1 + $0x128] sm:$0xff]
  %v60 = vld [vmem:[%s1 + $0x130] sm:$0xff]
  %v61 = vld [vmem:[%s1 + $0x138] sm:$0xff]
  %v62 = vld [vmem:[%s1 + $0x140] sm:$0xff]
  %v63 = vld [vmem:[%s1 + $0x148] sm:$0xff]
  %v64 = vld [vmem:[%s1 + $0x150] sm:$0xff]
  %v65 = vld [vmem:[%s1 + $0x158] sm:$0xff]
  %v66 = vld [vmem:[%s1 + $0x160] sm:$0xff]
  %v67 = vld [vmem:[%s1 + $0x168] sm:$0xff]
  %v68 = vld [vmem:[%s1 + $0x170] sm:$0xff]
  %v69 = vld [vmem:[%s1 + $0x178] sm:$0xff]
  %v70 = vld [vmem:[%s1 + $0x180] sm:$0xff]
  %v71 = vld [vmem:[%s1 + $0x188] sm:$0xff]
  %v72 = vld [vmem:[%s1 + $0x190] sm:$0xff]
  %v73 = vld [vmem:[%s1 + $0x198] sm:$0xff]
  %v74 = vld [vmem:[%s1 + $0x1a0] sm:$0xff]
  %v75 = vld [vmem:[%s1 + $0x1a8] sm:$0xff]
  %v76 = vld [vmem:[%s1 + $0x1b0] sm:$0xff]
  %v77 = vld [vmem:[%s1 + $0x1b8] sm:$0xff]
  %v78 = vld [vmem:[%s1 + $0x1c0] sm:$0xff]
  %v79 = vld [vmem:[%s1 + $0x1c8] sm:$0xff]
  %v80 = vld [vmem:[%s1 + $0x1d0] sm:$0xff]
  %v81 = vld [vmem:[%s1 + $0x1d8] sm:$0xff]
  %v82 = vld [vmem:[%s1 + $0x1e0] sm:$0xff]
  %v83 = vld [vmem:[%s1 + $0x1e8] sm:$0xff]
  %v84 = vld [vmem:[%s1 + $0x1f0] sm:$0xff]
  %v85 = vld [vmem:[%s1 + $0x1f8] sm:$0xff]
  %v86 = vld [vmem:[%s1 + $0x200] sm:$0xff]
  %v87 = vld [vmem:[%s1 + $0x208] sm:$0xff]
  %v88 = vld [vmem:[%s1 + $0x210] sm:$0xff]
  %v89 = vld [vmem:[%s1 + $0x218] sm:$0xff]
  %v90 = vld [vmem:[%s1 + $0x220] sm:$0xff]
  %v91 = vld [vmem:[%s1 + $0x228] sm:$0xff]
  %v92 = vld [vmem:[%s1 + $0x230] sm:$0xff]
  %v93 = vld [vmem:[%s1 + $0x238] sm:$0xff]
  %v94 = vld [vmem:[%s1 + $0x240] sm:$0xff]
  %v95 = vld [vmem:[%s1 + $0x248] sm:$0xff]
  %v96 = vld [vmem:[%s1 + $0x250] sm:$0xff]
  %v97 = vld [vmem:[%s1 + $0x258] sm:$0xff]
  %v98 = vld [vmem:[%s1 + $0x260] sm:$0xff]
  %v99 = vld [vmem:[%s1 + $0x268] sm:$0xff]
  %v100 = vld [vmem:[%s1 + $0x270] sm:$0xff]
  %v101 = vld [vmem:[%s1 + $0x278] sm:$0xff]
  %v102 = vld [vmem:[%s1 + $0x280] sm:$0xff]
  %v103 = vld [vmem:[%s1 + $0x288] sm:$0xff]
  %v104 = vld [vmem:[%s1 + $0x290] sm:$0xff]
  %v105 = vld [vmem:[%s1 + $0x298] sm:$0xff]
  %v106 = vld [vmem:[%s1 + $0x2a0] sm:$0xff]
  %v107 = vld [vmem:[%s1 + $0x2a8] sm:$0xff]
  %v108 = vld [vmem:[%s1 + $0x2b0] sm:$0xff]
  %v109 = vld [vmem:[%s1 + $0x2b8] sm:$0xff]
  %v110 = vld [vmem:[%s1 + $0x2c0] sm:$0xff]
  %v111 = vld [vmem:[%s1 + $0x2c8] sm:$0xff]
  %v112 = vld [vmem:[%s1 + $0x2d0] sm:$0xff]
  %v113 = vld [vmem:[%s1 + $0x2d8] sm:$0xff]
  %v114 = vld [vmem:[%s1 + $0x2e0] sm:$0xff]
  %v115 = vld [vmem:[%s1 + $0x2e8] sm:$0xff]
  %v116 = vld [vmem:[%s1 + $0x2f0] sm:$0xff]
  %v117 = vld [vmem:[%s1 + $0x2f8] sm:$0xff]
  %v118 = vld [vmem:[%s1 + $0x300] sm:$0xff]
  %v119 = vld [vmem:[%s1 + $0x308] sm:$0xff]
  %v120 = vld [vmem:[%s1 + $0x310] sm:$0xff]
  %v121 = vld [vmem:[%s1 + $0x318] sm:$0xff]
  %v122 = vld [vmem:[%s1 + $0x320] sm:$0xff]
  %v123 = vld [vmem:[%s1 + $0x328] sm:$0xff]
  %v124 = vld [vmem:[%s1 + $0x330] sm:$0xff]
  %v125 = vld [vmem:[%s1 + $0x338] sm:$0xff]
  %v126 = vld [vmem:[%s1 + $0x340] sm:$0xff]
  %v127 = vld [vmem:[%s1 + $0x348] sm:$0xff]
  %v128 = vld [vmem:[%s1 + $0x350] sm:$0xff]
  %v129 = vld [vmem:[%s1 + $0x358] sm:$0xff]
  %v130 = vld [vmem:[%s1 + $0x360] sm:$0xff]
  %v131 = vld [vmem:[%s1 + $0x368] sm:$0xff]
  %v132 = vld [vmem:[%s1 + $0x370] sm:$0xff]
  %v133 = vld [vmem:[%s1 + $0x378] sm:$0xff]
  %v134 = vld [vmem:[%s1 + $0x380] sm:$0xff]
  %v135 = vld [vmem:[%s1 + $0x388] sm:$0xff]
  %v136 = vld [vmem:[%s1 + $0x390] sm:$0xff]
  %v137 = vld [vmem:[%s1 + $0x398] sm:$0xff]
  %v138 = vld [vmem:[%s1 + $0x3a0] sm:$0xff]
  %v139 = vld [vmem:[%s1 + $0x3a8] sm:$0xff]
  %v140 = vld [vmem:[%s1 + $0x3b0] sm:$0xff]
  %v141 = vld [vmem:[%s1 + $0x3b8] sm:$0xff]
  %v142 = vld [vmem:[%s1 + $0x3c0] sm:$0xff]
  %v143 = vld [vmem:[%s1 + $0x3c8] sm:$0xff]
  %v144 = vld [vmem:[%s1 + $0x3d0] sm:$0xff]
  %v145 = vld [vmem:[%s1 + $0x3d8] sm:$0xff]
  %v146 = vld [vmem:[%s1 + $0x3e0] sm:$0xff]
  %v147 = vld [vmem:[%s1 + $0x3e8] sm:$0xff]
  %v148 = vld [vmem:[%s1 + $0x3f0] sm:$0xff]
  %v149 = vld [vmem:[%s1 + $0x3f8] sm:$0xff]
  %v150 = vld [vmem:[%s2] sm:$0x1]
  %v152 = vlaneseq
  %v153 = vshrl.u32 %v152, 7
  %v154 = vsub.s32 0, %v153
  %v155 = vrot.slane %v150, %v154
  %157 = vmatprep.subr.mxu0 0.0
  %158 = vmatpush1.msra.mxu0 %v22
  %159 = vmatprep.subr.mxu0 0.0
  %160 = vmatpush1.msra.mxu0 %v23
  %161 = vmatprep.subr.mxu0 0.0
  %162 = vmatpush1.msra.mxu0 %v24
  %163 = vmatprep.subr.mxu0 0.0
  %164 = vmatpush1.msra.mxu0 %v25
  %165 = vmatprep.subr.mxu0 0.0
  %166 = vmatpush1.msra.mxu0 %v26
  %167 = vmatprep.subr.mxu0 0.0
  %168 = vmatpush1.msra.mxu0 %v27
  %169 = vmatprep.subr.mxu0 0.0
  %170 = vmatpush1.msra.mxu0 %v28
  %171 = vmatprep.subr.mxu0 0.0
  %172 = vmatpush1.msra.mxu0 %v29
  %173 = vmatprep.subr.mxu0 0.0
  %174 = vmatpush1.msra.mxu0 %v30
  %175 = vmatprep.subr.mxu0 0.0
  %176 = vmatpush1.msra.mxu0 %v31
  %177 = vmatprep.subr.mxu0 0.0
  %178 = vmatpush1.msra.mxu0 %v32
  %179 = vmatprep.subr.mxu0 0.0
  %180 = vmatpush1.msra.mxu0 %v33
  %181 = vmatprep.subr.mxu0 0.0
  %182 = vmatpush1.msra.mxu0 %v34
  %183 = vmatprep.subr.mxu0 0.0
  %184 = vmatpush1.msra.mxu0 %v35
  %185 = vmatprep.subr.mxu0 0.0
  %186 = vmatpush1.msra.mxu0 %v36
  %187 = vmatprep.subr.mxu0 0.0
  %188 = vmatpush1.msra.mxu0 %v37
  %189 = vmatprep.subr.mxu0 0.0
  %190 = vmatpush1.msra.mxu0 %v38
  %191 = vmatprep.subr.mxu0 0.0
  %192 = vmatpush1.msra.mxu0 %v39
  %193 = vmatprep.subr.mxu0 0.0
  %194 = vmatpush1.msra.mxu0 %v40
  %195 = vmatprep.subr.mxu0 0.0
  %196 = vmatpush1.msra.mxu0 %v41
  %197 = vmatprep.subr.mxu0 0.0
  %198 = vmatpush1.msra.mxu0 %v42
  %199 = vmatprep.subr.mxu0 0.0
  %200 = vmatpush1.msra.mxu0 %v43
  %201 = vmatprep.subr.mxu0 0.0
  %202 = vmatpush1.msra.mxu0 %v44
  %203 = vmatprep.subr.mxu0 0.0
  %204 = vmatpush1.msra.mxu0 %v45
  %205 = vmatprep.subr.mxu0 0.0
  %206 = vmatpush1.msra.mxu0 %v46
  %207 = vmatprep.subr.mxu0 0.0
  %208 = vmatpush1.msra.mxu0 %v47
  %209 = vmatprep.subr.mxu0 0.0
  %210 = vmatpush1.msra.mxu0 %v48
  %211 = vmatprep.subr.mxu0 0.0
  %212 = vmatpush1.msra.mxu0 %v49
  %213 = vmatprep.subr.mxu0 0.0
  %214 = vmatpush1.msra.mxu0 %v50
  %215 = vmatprep.subr.mxu0 0.0
  %216 = vmatpush1.msra.mxu0 %v51
  %217 = vmatprep.subr.mxu0 0.0
  %218 = vmatpush1.msra.mxu0 %v52
  %219 = vmatprep.subr.mxu0 0.0
  %220 = vmatpush1.msra.mxu0 %v53
  %221 = vmatprep.mubr.f32.mxu0 %v15
  %222 = vmatmul.mubr.f32.gmra.mrb[0].mxu0 %v14
  %v223 = vpop.f32.mrb[0].mxu0
  %v224 = vadd.f32 %v155, %v223
  %v225 = vpop.f32.mrb[0].mxu0
  %226 = vdwg.mxu0
  %227 = vmatprep.subr.mxu0 0.0
  %228 = vmatpush1.msra.mxu0 %v54
  %229 = vmatprep.subr.mxu0 0.0
  %230 = vmatpush1.msra.mxu0 %v55
  %231 = vmatprep.subr.mxu0 0.0
  %232 = vmatpush1.msra.mxu0 %v56
  %233 = vmatprep.subr.mxu0 0.0
  %234 = vmatpush1.msra.mxu0 %v57
  %235 = vmatprep.subr.mxu0 0.0
  %236 = vmatpush1.msra.mxu0 %v58
  %237 = vmatprep.subr.mxu0 0.0
  %238 = vmatpush1.msra.mxu0 %v59
  %239 = vmatprep.subr.mxu0 0.0
  %240 = vmatpush1.msra.mxu0 %v60
  %241 = vmatprep.subr.mxu0 0.0
  %242 = vmatpush1.msra.mxu0 %v61
  %243 = vmatprep.subr.mxu0 0.0
  %244 = vmatpush1.msra.mxu0 %v62
  %245 = vmatprep.subr.mxu0 0.0
  %246 = vmatpush1.msra.mxu0 %v63
  %247 = vmatprep.subr.mxu0 0.0
  %248 = vmatpush1.msra.mxu0 %v64
  %249 = vmatprep.subr.mxu0 0.0
  %250 = vmatpush1.msra.mxu0 %v65
  %251 = vmatprep.subr.mxu0 0.0
  %252 = vmatpush1.msra.mxu0 %v66
  %253 = vmatprep.subr.mxu0 0.0
  %254 = vmatpush1.msra.mxu0 %v67
  %255 = vmatprep.subr.mxu0 0.0
  %256 = vmatpush1.msra.mxu0 %v68
  %257 = vmatprep.subr.mxu0 0.0
  %258 = vmatpush1.msra.mxu0 %v69
  %259 = vmatprep.subr.mxu0 0.0
  %260 = vmatpush1.msra.mxu0 %v70
  %261 = vmatprep.subr.mxu0 0.0
  %262 = vmatpush1.msra.mxu0 %v71
  %263 = vmatprep.subr.mxu0 0.0
  %264 = vmatpush1.msra.mxu0 %v72
  %265 = vmatprep.subr.mxu0 0.0
  %266 = vmatpush1.msra.mxu0 %v73
  %267 = vmatprep.subr.mxu0 0.0
  %268 = vmatpush1.msra.mxu0 %v74
  %269 = vmatprep.subr.mxu0 0.0
  %270 = vmatpush1.msra.mxu0 %v75
  %271 = vmatprep.subr.mxu0 0.0
  %272 = vmatpush1.msra.mxu0 %v76
  %273 = vmatprep.subr.mxu0 0.0
  %274 = vmatpush1.msra.mxu0 %v77
  %275 = vmatprep.subr.mxu0 0.0
  %276 = vmatpush1.msra.mxu0 %v78
  %277 = vmatprep.subr.mxu0 0.0
  %278 = vmatpush1.msra.mxu0 %v79
  %279 = vmatprep.subr.mxu0 0.0
  %280 = vmatpush1.msra.mxu0 %v80
  %281 = vmatprep.subr.mxu0 0.0
  %282 = vmatpush1.msra.mxu0 %v81
  %283 = vmatprep.subr.mxu0 0.0
  %284 = vmatpush1.msra.mxu0 %v82
  %285 = vmatprep.subr.mxu0 0.0
  %286 = vmatpush1.msra.mxu0 %v83
  %287 = vmatprep.subr.mxu0 0.0
  %288 = vmatpush1.msra.mxu0 %v84
  %289 = vmatprep.subr.mxu0 0.0
  %290 = vmatpush1.msra.mxu0 %v85
  %291 = vmatprep.mubr.f32.mxu0 %v17
  %292 = vmatmul.mubr.f32.gmra.mrb[0].mxu0 %v16
  %v293 = vpop.f32.mrb[0].mxu0
  %v294 = vadd.f32 %v224, %v293
  %v295 = vpop.f32.mrb[0].mxu0
  %296 = vdwg.mxu0
  %297 = vmatprep.subr.mxu0 0.0
  %298 = vmatpush1.msra.mxu0 %v86
  %299 = vmatprep.subr.mxu0 0.0
  %300 = vmatpush1.msra.mxu0 %v87
  %301 = vmatprep.subr.mxu0 0.0
  %302 = vmatpush1.msra.mxu0 %v88
  %303 = vmatprep.subr.mxu0 0.0
  %304 = vmatpush1.msra.mxu0 %v89
  %305 = vmatprep.subr.mxu0 0.0
  %306 = vmatpush1.msra.mxu0 %v90
  %307 = vmatprep.subr.mxu0 0.0
  %308 = vmatpush1.msra.mxu0 %v91
  %309 = vmatprep.subr.mxu0 0.0
  %310 = vmatpush1.msra.mxu0 %v92
  %311 = vmatprep.subr.mxu0 0.0
  %312 = vmatpush1.msra.mxu0 %v93
  %313 = vmatprep.subr.mxu0 0.0
  %314 = vmatpush1.msra.mxu0 %v94
  %315 = vmatprep.subr.mxu0 0.0
  %316 = vmatpush1.msra.mxu0 %v95
  %317 = vmatprep.subr.mxu0 0.0
  %318 = vmatpush1.msra.mxu0 %v96
  %319 = vmatprep.subr.mxu0 0.0
  %320 = vmatpush1.msra.mxu0 %v97
  %321 = vmatprep.subr.mxu0 0.0
  %322 = vmatpush1.msra.mxu0 %v98
  %323 = vmatprep.subr.mxu0 0.0
  %324 = vmatpush1.msra.mxu0 %v99
  %325 = vmatprep.subr.mxu0 0.0
  %326 = vmatpush1.msra.mxu0 %v100
  %327 = vmatprep.subr.mxu0 0.0
  %328 = vmatpush1.msra.mxu0 %v101
  %329 = vmatprep.subr.mxu0 0.0
  %330 = vmatpush1.msra.mxu0 %v102
  %331 = vmatprep.subr.mxu0 0.0
  %332 = vmatpush1.msra.mxu0 %v103
  %333 = vmatprep.subr.mxu0 0.0
  %334 = vmatpush1.msra.mxu0 %v104
  %335 = vmatprep.subr.mxu0 0.0
  %336 = vmatpush1.msra.mxu0 %v105
  %337 = vmatprep.subr.mxu0 0.0
  %338 = vmatpush1.msra.mxu0 %v106
  %339 = vmatprep.subr.mxu0 0.0
  %340 = vmatpush1.msra.mxu0 %v107
  %341 = vmatprep.subr.mxu0 0.0
  %342 = vmatpush1.msra.mxu0 %v108
  %343 = vmatprep.subr.mxu0 0.0
  %344 = vmatpush1.msra.mxu0 %v109
  %345 = vmatprep.subr.mxu0 0.0
  %346 = vmatpush1.msra.mxu0 %v110
  %347 = vmatprep.subr.mxu0 0.0
  %348 = vmatpush1.msra.mxu0 %v111
  %349 = vmatprep.subr.mxu0 0.0
  %350 = vmatpush1.msra.mxu0 %v112
  %351 = vmatprep.subr.mxu0 0.0
  %352 = vmatpush1.msra.mxu0 %v113
  %353 = vmatprep.subr.mxu0 0.0
  %354 = vmatpush1.msra.mxu0 %v114
  %355 = vmatprep.subr.mxu0 0.0
  %356 = vmatpush1.msra.mxu0 %v115
  %357 = vmatprep.subr.mxu0 0.0
  %358 = vmatpush1.msra.mxu0 %v116
  %359 = vmatprep.subr.mxu0 0.0
  %360 = vmatpush1.msra.mxu0 %v117
  %361 = vmatprep.mubr.f32.mxu0 %v19
  %362 = vmatmul.mubr.f32.gmra.mrb[0].mxu0 %v18
  %v363 = vpop.f32.mrb[0].mxu0
  %v364 = vadd.f32 %v294, %v363
  %v365 = vpop.f32.mrb[0].mxu0
  %366 = vdwg.mxu0
  %367 = vmatprep.subr.mxu0 0.0
  %368 = vmatpush1.msra.mxu0 %v118
  %369 = vmatprep.subr.mxu0 0.0
  %370 = vmatpush1.msra.mxu0 %v119
  %371 = vmatprep.subr.mxu0 0.0
  %372 = vmatpush1.msra.mxu0 %v120
  %373 = vmatprep.subr.mxu0 0.0
  %374 = vmatpush1.msra.mxu0 %v121
  %375 = vmatprep.subr.mxu0 0.0
  %376 = vmatpush1.msra.mxu0 %v122
  %377 = vmatprep.subr.mxu0 0.0
  %378 = vmatpush1.msra.mxu0 %v123
  %379 = vmatprep.subr.mxu0 0.0
  %380 = vmatpush1.msra.mxu0 %v124
  %381 = vmatprep.subr.mxu0 0.0
  %382 = vmatpush1.msra.mxu0 %v125
  %383 = vmatprep.subr.mxu0 0.0
  %384 = vmatpush1.msra.mxu0 %v126
  %385 = vmatprep.subr.mxu0 0.0
  %386 = vmatpush1.msra.mxu0 %v127
  %387 = vmatprep.subr.mxu0 0.0
  %388 = vmatpush1.msra.mxu0 %v128
  %389 = vmatprep.subr.mxu0 0.0
  %390 = vmatpush1.msra.mxu0 %v129
  %391 = vmatprep.subr.mxu0 0.0
  %392 = vmatpush1.msra.mxu0 %v130
  %393 = vmatprep.subr.mxu0 0.0
  %394 = vmatpush1.msra.mxu0 %v131
  %395 = vmatprep.subr.mxu0 0.0
  %396 = vmatpush1.msra.mxu0 %v132
  %397 = vmatprep.subr.mxu0 0.0
  %398 = vmatpush1.msra.mxu0 %v133
  %399 = vmatprep.subr.mxu0 0.0
  %400 = vmatpush1.msra.mxu0 %v134
  %401 = vmatprep.subr.mxu0 0.0
  %402 = vmatpush1.msra.mxu0 %v135
  %403 = vmatprep.subr.mxu0 0.0
  %404 = vmatpush1.msra.mxu0 %v136
  %405 = vmatprep.subr.mxu0 0.0
  %406 = vmatpush1.msra.mxu0 %v137
  %407 = vmatprep.subr.mxu0 0.0
  %408 = vmatpush1.msra.mxu0 %v138
  %409 = vmatprep.subr.mxu0 0.0
  %410 = vmatpush1.msra.mxu0 %v139
  %411 = vmatprep.subr.mxu0 0.0
  %412 = vmatpush1.msra.mxu0 %v140
  %413 = vmatprep.subr.mxu0 0.0
  %414 = vmatpush1.msra.mxu0 %v141
  %415 = vmatprep.subr.mxu0 0.0
  %416 = vmatpush1.msra.mxu0 %v142
  %417 = vmatprep.subr.mxu0 0.0
  %418 = vmatpush1.msra.mxu0 %v143
  %419 = vmatprep.subr.mxu0 0.0
  %420 = vmatpush1.msra.mxu0 %v144
  %421 = vmatprep.subr.mxu0 0.0
  %422 = vmatpush1.msra.mxu0 %v145
  %423 = vmatprep.subr.mxu0 0.0
  %424 = vmatpush1.msra.mxu0 %v146
  %425 = vmatprep.subr.mxu0 0.0
  %426 = vmatpush1.msra.mxu0 %v147
  %427 = vmatprep.subr.mxu0 0.0
  %428 = vmatpush1.msra.mxu0 %v148
  %429 = vmatprep.subr.mxu0 0.0
  %430 = vmatpush1.msra.mxu0 %v149
  %431 = vmatprep.mubr.f32.mxu0 %v21
  %432 = vmatmul.mubr.f32.gmra.mrb[0].mxu0 %v20
  %v433 = vpop.f32.mrb[0].mxu0
  %v434 = vadd.f32 %v364, %v433
  %v435 = vpop.f32.mrb[0].mxu0
  %436 = vdwg.mxu0
  %437 = vst [vmem:[%s3] sm:$0xff] %v434
  // Predicated region
  $region14: #{linear_classifier_forward.1} parent=0 // pred_check
    _
  $region15: #{linear_classifier_forward.1} parent=0 // pred_check_branch
    %439 = sbr.rel (0) target = $region17
  $region16: #{linear_classifier_forward.1} parent=0 // pred_region
    _
  $region17: #{linear_classifier_forward.1} parent=0 // pred_fallthru
    _
  // Predicated region
  $region18: #{linear_classifier_forward.1} parent=0 // pred_check
    _
  $region19: #{linear_classifier_forward.1} parent=0 // pred_check_branch
    %441 = sbr.rel (0) target = $region21
  $region20: #{linear_classifier_forward.1} parent=0 // pred_region
    _
  $region21: #{linear_classifier_forward.1} parent=0 // pred_fallthru
    _

</llo_original>
